<compile_context>
chip_gen: v6e
topology: v6e:2x2x1
jax: 0.10.0
libtpu: 0.0.40
codegen_flags: <defaults>
</compile_context>

<pallas_src>
import functools

import jax
import jax.numpy as jnp
from jax.experimental import pallas as pl
from jax.experimental.pallas import tpu as pltpu


def _simple_cnn_kernel(xcol_ref, wconv_ref, bconv_ref, wfc_ref, bfc_ref, o_ref, *, L):
    # xcol_ref:  (TB*L, 3*C_in)  im2col rows (conv pad=1 pre-applied) for TB batch elems
    # wconv_ref: (3*C_in, C_out) stacked conv taps, so conv == one matmul
    # bconv_ref: (1, C_out)
    # wfc_ref:   (C_out, NC)
    # bfc_ref:   (1, NC)
    # o_ref:     (TB, NC)
    TB = o_ref.shape[0]

    # Conv1d(k=3, pad=1) as a single im2col matmul, fused with bias + ReLU.
    y = jnp.dot(xcol_ref[...], wconv_ref[...], preferred_element_type=jnp.float32)
    y = jnp.maximum(y + bconv_ref[...], 0.0)                       # (TB*L, C_out)

    # AdaptiveMaxPool1d(1): max over the L rows of each batch element.
    # Static, sublane-aligned slices (L % 8 == 0) -> plain 2D sublane reductions.
    pooled = jnp.concatenate(
        [jnp.max(y[t * L:(t + 1) * L, :], axis=0, keepdims=True) for t in range(TB)],
        axis=0)                                                    # (TB, C_out)

    # Linear(C_out -> NC), one matmul for the whole batch tile, single 2D store.
    o_ref[...] = (jnp.dot(pooled, wfc_ref[...], preferred_element_type=jnp.float32)
                  + bfc_ref[...])


def _choose_tb(B):
    # One grid step for small batches (per-step overhead dominates everything at these
    # shapes). Only split into two "parallel" steps (v7x has 2 TensorCores) when the
    # half-batch keeps the output block sublane-aligned (multiple of 8 rows).
    if B >= 16 and B % 2 == 0 and (B // 2) % 8 == 0:
        return B // 2
    return B


@jax.jit
def simple_cnn_forward(x_ncl, conv_w, conv_b, fc_w, fc_b):
    """x_ncl: (B, C_in, L) float32 (PyTorch NCL layout).
       conv_w: (C_out, C_in, 3), conv_b: (C_out,), fc_w: (NC, C_out), fc_b: (NC,)."""
    B, C_in, L = x_ncl.shape
    C_out = conv_w.shape[0]
    NC = fc_w.shape[0]

    # --- im2col prep (fused by XLA under this jit; single small HBM producer) ---
    # (B, C_in, L) -> (B, L, C_in), zero-pad length by 1 each side, gather 3 taps on lanes.
    x_blc = jnp.transpose(x_ncl, (0, 2, 1)).astype(jnp.float32)     # (B, L, C_in)
    x_pad = jnp.pad(x_blc, ((0, 0), (1, 1), (0, 0)))                # (B, L+2, C_in)
    xcol = jnp.concatenate(
        [x_pad[:, 0:L, :], x_pad[:, 1:L + 1, :], x_pad[:, 2:L + 2, :]], axis=-1)
    xcol = xcol.reshape(B * L, 3 * C_in)                            # (B*L, 3*C_in)

    # Stacked conv weights: W[k*C_in + c, o] = conv_w[o, c, k]  (matches im2col layout).
    wconv = jnp.transpose(conv_w, (2, 1, 0)).reshape(3 * C_in, C_out).astype(jnp.float32)
    bconv = conv_b.reshape(1, C_out).astype(jnp.float32)
    wfc = jnp.transpose(fc_w, (1, 0)).astype(jnp.float32)           # (C_out, NC)
    bfc = fc_b.reshape(1, NC).astype(jnp.float32)

    TB = _choose_tb(B)
    grid = (B // TB,)
    kernel = functools.partial(_simple_cnn_kernel, L=L)

    out = pl.pallas_call(
        kernel,
        out_shape=jax.ShapeDtypeStruct((B, NC), jnp.float32),
        grid_spec=pltpu.PrefetchScalarGridSpec(
            num_scalar_prefetch=0,
            grid=grid,
            in_specs=[
                pl.BlockSpec((TB * L, 3 * C_in), lambda b: (b, 0)),   # im2col batch tile
                pl.BlockSpec((3 * C_in, C_out), lambda b: (0, 0)),    # conv weights (resident)
                pl.BlockSpec((1, C_out), lambda b: (0, 0)),           # conv bias
                pl.BlockSpec((C_out, NC), lambda b: (0, 0)),          # fc weight
                pl.BlockSpec((1, NC), lambda b: (0, 0)),              # fc bias
            ],
            out_specs=pl.BlockSpec((TB, NC), lambda b: (b, 0)),       # 2D lane-contig slab
        ),
        compiler_params=pltpu.CompilerParams(
            dimension_semantics=("parallel",)),
    )(xcol, wconv, bconv, wfc, bfc)

    return out


def _reference_forward(x_ncl, conv_w, conv_b, fc_w, fc_b):
    """Pure-JAX reference matching PyTorch SimpleCNN.forward semantics."""
    B, C_in, L = x_ncl.shape
    x_blc = jnp.transpose(x_ncl, (0, 2, 1))
    x_pad = jnp.pad(x_blc, ((0, 0), (1, 1), (0, 0)))  # (B, L+2, C_in)
    wk = jnp.transpose(conv_w, (2, 1, 0))             # (3, C_in, C_out)
    y = (jnp.einsum("blc,co->blo", x_pad[:, 0:L], wk[0])
         + jnp.einsum("blc,co->blo", x_pad[:, 1:L + 1], wk[1])
         + jnp.einsum("blc,co->blo", x_pad[:, 2:L + 2], wk[2])
         + conv_b[None, None, :])
    y = jnp.maximum(y, 0.0)
    pooled = jnp.max(y, axis=1)                       # (B, C_out)
    return pooled @ fc_w.T + fc_b[None, :]


if __name__ == "__main__":
    key = jax.random.PRNGKey(0)
    k_x, k_cw, k_cb, k_fw, k_fb = jax.random.split(key, 5)

    B, C_in, L, NC = 2, 4, 16, 8   # input_channels=4, num_classes=8, seq length 16

    x = jax.random.normal(k_x, (B, C_in, L), dtype=jnp.float32)
    conv_w = jax.random.normal(k_cw, (32, C_in, 3), dtype=jnp.float32) * 0.1
    conv_b = jax.random.normal(k_cb, (32,), dtype=jnp.float32) * 0.1
    fc_w = jax.random.normal(k_fw, (NC, 32), dtype=jnp.float32) * 0.1
    fc_b = jax.random.normal(k_fb, (NC,), dtype=jnp.float32) * 0.1

    out = jax.block_until_ready(simple_cnn_forward(x, conv_w, conv_b, fc_w, fc_b))

    ref = _reference_forward(x, conv_w, conv_b, fc_w, fc_b)
    assert out.shape == (B, NC)
    assert jnp.allclose(out, ref, atol=1e-4, rtol=1e-4)

    print("KERNEL_OK")
</pallas_src>

<mosaic_0001>
module attributes {stable_mosaic.version = 11 : i64} {
  func.func @_simple_cnn_kernel(%arg0: i32, %arg1: memref<32x12xf32, #tpu.memory_space<vmem>>, %arg2: memref<12x32xf32, #tpu.memory_space<vmem>>, %arg3: memref<1x32xf32, #tpu.memory_space<vmem>>, %arg4: memref<32x8xf32, #tpu.memory_space<vmem>>, %arg5: memref<1x8xf32, #tpu.memory_space<vmem>>, %arg6: memref<2x8xf32, #tpu.memory_space<vmem>>) attributes {dimension_semantics = [#tpu.dimension_semantics<parallel>], iteration_bounds = array<i64: 1>, scalar_prefetch = 0 : i64, scratch_operands = 0 : i64, tpu.core_type = #tpu.core_type<tc>, window_params = [{transform_indices = @transform_0, window_bounds = array<i64: 32, 12>}, {pipeline_mode = #tpu.pipeline_mode<synchronous>, transform_indices = @transform_1, window_bounds = array<i64: 12, 32>}, {pipeline_mode = #tpu.pipeline_mode<synchronous>, transform_indices = @transform_2, window_bounds = array<i64: 1, 32>}, {pipeline_mode = #tpu.pipeline_mode<synchronous>, transform_indices = @transform_3, window_bounds = array<i64: 32, 8>}, {pipeline_mode = #tpu.pipeline_mode<synchronous>, transform_indices = @transform_4, window_bounds = array<i64: 1, 8>}, {transform_indices = @transform_5, window_bounds = array<i64: 2, 8>}]} {
    %c0 = arith.constant 0 : index
    %c0_0 = arith.constant 0 : index
    %0 = vector.load %arg1[%c0, %c0_0] : memref<32x12xf32, #tpu.memory_space<vmem>>, vector<32x12xf32>
    %c0_1 = arith.constant 0 : index
    %c0_2 = arith.constant 0 : index
    %1 = vector.load %arg2[%c0_1, %c0_2] : memref<12x32xf32, #tpu.memory_space<vmem>>, vector<12x32xf32>
    %cst = arith.constant dense<0.000000e+00> : vector<32x32xf32>
    %2 = tpu.matmul %0, %1, %cst {dimension_numbers = #tpu.dot_dimension_numbers<[1], [0], [0], [1], [0, 0, 1, 1], [], []>} : vector<32x12xf32>, vector<12x32xf32>, vector<32x32xf32> -> vector<32x32xf32>
    %c0_3 = arith.constant 0 : index
    %c0_4 = arith.constant 0 : index
    %3 = vector.load %arg3[%c0_3, %c0_4] : memref<1x32xf32, #tpu.memory_space<vmem>>, vector<1x32xf32>
    %4 = vector.broadcast %3 : vector<1x32xf32> to vector<32x32xf32>
    %5 = arith.addf %2, %4 : vector<32x32xf32>
    %cst_5 = arith.constant 0.000000e+00 : f32
    %6 = vector.broadcast %cst_5 : f32 to vector<32x32xf32>
    %7 = arith.maximumf %5, %6 : vector<32x32xf32>
    %8 = vector.extract_strided_slice %7 {offsets = [0, 0], sizes = [16, 32], strides = [1, 1]} : vector<32x32xf32> to vector<16x32xf32>
    %cst_6 = arith.constant dense<0xFF800000> : vector<32xf32>
    %9 = vector.multi_reduction <maximumf>, %8, %cst_6 [0] : vector<16x32xf32> to vector<32xf32>
    %10 = vector.shape_cast %9 : vector<32xf32> to vector<1x32xf32>
    %11 = vector.extract_strided_slice %7 {offsets = [16, 0], sizes = [16, 32], strides = [1, 1]} : vector<32x32xf32> to vector<16x32xf32>
    %cst_7 = arith.constant dense<0xFF800000> : vector<32xf32>
    %12 = vector.multi_reduction <maximumf>, %11, %cst_7 [0] : vector<16x32xf32> to vector<32xf32>
    %13 = vector.shape_cast %12 : vector<32xf32> to vector<1x32xf32>
    %14 = tpu.concatenate %10, %13 in 0 : vector<1x32xf32>, vector<1x32xf32> -> vector<2x32xf32>
    %c0_8 = arith.constant 0 : index
    %c0_9 = arith.constant 0 : index
    %15 = vector.load %arg4[%c0_8, %c0_9] : memref<32x8xf32, #tpu.memory_space<vmem>>, vector<32x8xf32>
    %cst_10 = arith.constant dense<0.000000e+00> : vector<2x8xf32>
    %16 = tpu.matmul %14, %15, %cst_10 {dimension_numbers = #tpu.dot_dimension_numbers<[1], [0], [0], [1], [0, 0, 1, 1], [], []>} : vector<2x32xf32>, vector<32x8xf32>, vector<2x8xf32> -> vector<2x8xf32>
    %c0_11 = arith.constant 0 : index
    %c0_12 = arith.constant 0 : index
    %17 = vector.load %arg5[%c0_11, %c0_12] : memref<1x8xf32, #tpu.memory_space<vmem>>, vector<1x8xf32>
    %18 = vector.broadcast %17 : vector<1x8xf32> to vector<2x8xf32>
    %19 = arith.addf %16, %18 : vector<2x8xf32>
    %c0_13 = arith.constant 0 : index
    %c0_14 = arith.constant 0 : index
    %20 = vector.load %arg6[%c0_13, %c0_14] : memref<2x8xf32, #tpu.memory_space<vmem>>, vector<2x8xf32>
    tpu.vector_store %arg6[%c0_13, %c0_14], %19 {strides = array<i32>} : memref<2x8xf32, #tpu.memory_space<vmem>>, vector<2x8xf32>,
    return
  }
  func.func @transform_0(%arg0: i32) -> (i32, i32) {
    %c0_i32 = arith.constant 0 : i32
    %c0_i32_0 = arith.constant 0 : i32
    return %arg0, %c0_i32 : i32, i32
  }
  func.func @transform_1(%arg0: i32) -> (i32, i32) {
    %c0_i32 = arith.constant 0 : i32
    %c0_i32_0 = arith.constant 0 : i32
    %c0_i32_1 = arith.constant 0 : i32
    return %c0_i32, %c0_i32_0 : i32, i32
  }
  func.func @transform_2(%arg0: i32) -> (i32, i32) {
    %c0_i32 = arith.constant 0 : i32
    %c0_i32_0 = arith.constant 0 : i32
    %c0_i32_1 = arith.constant 0 : i32
    return %c0_i32, %c0_i32_0 : i32, i32
  }
  func.func @transform_3(%arg0: i32) -> (i32, i32) {
    %c0_i32 = arith.constant 0 : i32
    %c0_i32_0 = arith.constant 0 : i32
    %c0_i32_1 = arith.constant 0 : i32
    return %c0_i32, %c0_i32_0 : i32, i32
  }
  func.func @transform_4(%arg0: i32) -> (i32, i32) {
    %c0_i32 = arith.constant 0 : i32
    %c0_i32_0 = arith.constant 0 : i32
    %c0_i32_1 = arith.constant 0 : i32
    return %c0_i32, %c0_i32_0 : i32, i32
  }
  func.func @transform_5(%arg0: i32) -> (i32, i32) {
    %c0_i32 = arith.constant 0 : i32
    %c0_i32_0 = arith.constant 0 : i32
    return %arg0, %c0_i32 : i32, i32
  }
}

</mosaic_0001>

<llo_original>
// kernel: simple_cnn_forward.1
$region0: #{simple_cnn_forward.1}
  #allocation0 [shape = 'u32[]', space=smem, size = 0x4, offset = 0x4, fixed_abs, tag = 'smem constant byte address 0x4 - core index']
  #allocation1 [shape = 'u32[144,128]{1,0:T(1,128)}', space=vmem, size = 0x12000, scoped, tag = 'internal scratch']
  %s0 = inlined_call_operand.vmem [shape: f32[32,12], index: 0, kind: input, shape index: {}]
  %s1 = inlined_call_operand.vmem [shape: f32[12,32], index: 1, kind: input, shape index: {}]
  %s2 = inlined_call_operand.vmem [shape: f32[1,32], index: 2, kind: input, shape index: {}]
  %s3 = inlined_call_operand.vmem [shape: f32[32,8], index: 3, kind: input, shape index: {}]
  %s4 = inlined_call_operand.vmem [shape: f32[1,8], index: 4, kind: input, shape index: {}]
  %s5 = inlined_call_operand.hbm [shape: f32[2,8], index: 5, kind: output, shape index: {}]
  %s6 = sld [smem:[#allocation0]]
  $region30: #{simple_cnn_forward.1} parent=0
    _
  %s8 = ssub.s32 1, %s6
  %s9 = scalar_select 0, %s8, %s6
  $region1: #{simple_cnn_forward.1} parent=0
    #allocation2 [shape = 'u8[1024]{0}', space=vmem, size = 0x400, scoped, tag = 'output window, operand 0, single buffered']
    #allocation3 [shape = 's32[1]{0}', space=sflag, size = 0x4, scoped, tag = 'scoped memory for simple_cnn_forward.1']
    %10 = vsyncpa [#allocation3], 0
    // Predicated region
    $region2: #{simple_cnn_forward.1} parent=1 // pred_check
      _
    $region3: #{simple_cnn_forward.1} parent=1 // pred_check_branch
      %12 = sbr.rel (0) target = $region5
    $region4: #{simple_cnn_forward.1} parent=1 // pred_region
      _
    $region5: #{simple_cnn_forward.1} parent=1 // pred_fallthru
      _
    // Predicated region
    $region6: #{simple_cnn_forward.1} parent=1 // pred_check
      _
    $region7: #{simple_cnn_forward.1} parent=1 // pred_check_branch
      %14 = sbr.rel (0) target = $region9
    $region8: #{simple_cnn_forward.1} parent=1 // pred_region
      _
    $region9: #{simple_cnn_forward.1} parent=1 // pred_fallthru
      _
    // Predicated region
    $region10: #{simple_cnn_forward.1} parent=1 // pred_check
      _
    $region11: #{simple_cnn_forward.1} parent=1 // pred_check_branch
      %16 = sbr.rel (0) target = $region13
    $region12: #{simple_cnn_forward.1} parent=1 // pred_region
      _
    $region13: #{simple_cnn_forward.1} parent=1 // pred_fallthru
      _
    // Predicated region
    $region14: #{simple_cnn_forward.1} parent=1 // pred_check
      _
    $region15: #{simple_cnn_forward.1} parent=1 // pred_check_branch
      %18 = sbr.rel (0) target = $region17
    $region16: #{simple_cnn_forward.1} parent=1 // pred_region
      _
    $region17: #{simple_cnn_forward.1} parent=1 // pred_fallthru
      _
    // Predicated region
    $region18: #{simple_cnn_forward.1} parent=1 // pred_check
      _
    $region19: #{simple_cnn_forward.1} parent=1 // pred_check_branch
      %20 = sbr.rel (0) target = $region21
    $region20: #{simple_cnn_forward.1} parent=1 // pred_region
      _
    $region21: #{simple_cnn_forward.1} parent=1 // pred_fallthru
      _
    %v21 = vld [vmem:[%s0] sm:$0xff]
    %v22 = vld [vmem:[%s0 + $0x8] sm:$0xff]
    %v23 = vld [vmem:[%s0 + $0x10] sm:$0xff]
    %v24 = vld [vmem:[%s0 + $0x18] sm:$0xff]
    %v25 = vld [vmem:[%s1] sm:$0xff]
    %v26 = vld [vmem:[%s1 + $0x8] sm:$0xf]
    %v27 = vld [vmem:[%s2] sm:$0x1]
    %v29 = vlaneseq
    %v30 = vshrl.u32 %v29, 7
    %v31 = vsub.s32 0, %v30
    %v32 = vrot.slane %v27, %v31
    %vm34 = vcmask 97280
    %v36 = vsel %vm34, %v21, 0
    %v39 = vsel %vm34, %v22, 0
    %v42 = vsel %vm34, %v23, 0
    %v45 = vsel %vm34, %v24, 0
    %vm47 = vcmask 1043456
    %v49 = vsel %vm47, %v26, 0
    %51 = vmatprep.subr.mxu0 0.0
    %52 = vmatpush1.msra.mxu0 0.0
    %53 = vmatprep.subr.mxu0 0.0
    %54 = vmatpush1.msra.mxu0 0.0
    %55 = vmatprep.subr.mxu0 0.0
    %56 = vmatpush1.msra.mxu0 0.0
    %57 = vmatprep.subr.mxu0 0.0
    %58 = vmatpush1.msra.mxu0 0.0
    %59 = vmatprep.subr.mxu0 0.0
    %60 = vmatpush1.msra.mxu0 0.0
    %61 = vmatprep.subr.mxu0 0.0
    %62 = vmatpush1.msra.mxu0 0.0
    %63 = vmatprep.subr.mxu0 0.0
    %64 = vmatpush1.msra.mxu0 0.0
    %65 = vmatprep.subr.mxu0 0.0
    %66 = vmatpush1.msra.mxu0 0.0
    %67 = vmatprep.subr.mxu0 0.0
    %68 = vmatpush1.msra.mxu0 0.0
    %69 = vmatprep.subr.mxu0 0.0
    %70 = vmatpush1.msra.mxu0 0.0
    %71 = vmatprep.subr.mxu0 0.0
    %72 = vmatpush1.msra.mxu0 0.0
    %73 = vmatprep.subr.mxu0 0.0
    %74 = vmatpush1.msra.mxu0 0.0
    %75 = vmatprep.subr.mxu0 0.0
    %76 = vmatpush1.msra.mxu0 0.0
    %77 = vmatprep.subr.mxu0 0.0
    %78 = vmatpush1.msra.mxu0 0.0
    %79 = vmatprep.subr.mxu0 0.0
    %80 = vmatpush1.msra.mxu0 %v49
    %81 = vmatprep.subr.mxu0 0.0
    %82 = vmatpush1.msra.mxu0 %v25
    %83 = vmatprep.subr.mxu0 0.0
    %84 = vmatpush2.msra.mxu0 0.0
    %85 = vmatprep.subr.mxu0 0.0
    %86 = vmatpush2.msra.mxu0 0.0
    %87 = vmatprep.subr.mxu0 0.0
    %88 = vmatpush2.msra.mxu0 0.0
    %89 = vmatprep.subr.mxu0 0.0
    %90 = vmatpush2.msra.mxu0 0.0
    %91 = vmatprep.subr.mxu0 0.0
    %92 = vmatpush2.msra.mxu0 0.0
    %93 = vmatprep.subr.mxu0 0.0
    %94 = vmatpush2.msra.mxu0 0.0
    %95 = vmatprep.subr.mxu0 0.0
    %96 = vmatpush2.msra.mxu0 0.0
    %97 = vmatprep.subr.mxu0 0.0
    %98 = vmatpush2.msra.mxu0 0.0
    %99 = vmatprep.subr.mxu0 0.0
    %100 = vmatpush2.msra.mxu0 0.0
    %101 = vmatprep.subr.mxu0 0.0
    %102 = vmatpush2.msra.mxu0 0.0
    %103 = vmatprep.subr.mxu0 0.0
    %104 = vmatpush2.msra.mxu0 0.0
    %105 = vmatprep.subr.mxu0 0.0
    %106 = vmatpush2.msra.mxu0 0.0
    %107 = vmatprep.subr.mxu0 0.0
    %108 = vmatpush2.msra.mxu0 0.0
    %109 = vmatprep.subr.mxu0 0.0
    %110 = vmatpush2.msra.mxu0 0.0
    %111 = vmatprep.subr.mxu0 0.0
    %112 = vmatpush2.msra.mxu0 0.0
    %113 = vmatprep.subr.mxu0 0.0
    %114 = vmatpush2.msra.mxu0 0.0
    %115 = vmatprep.mubr.f32.mxu0 0.0
    %116 = vmatmul.mubr.f32.gmra.mxu0 %v36
    %v117 = vpop.f32.mrf.mxu0
    %v118 = vadd.f32 %v32, %v117
    %v119 = vpop.f32.mrf.mxu0
    %120 = vmatprep.mubr.f32.mxu0 0.0
    %121 = vmatmul.mubr.f32.gmra.mxu0 %v39
    %v122 = vpop.f32.mrf.mxu0
    %v123 = vadd.f32 %v32, %v122
    %v124 = vpop.f32.mrf.mxu0
    %125 = vmatprep.mubr.f32.mxu0 0.0
    %126 = vmatmul.mubr.f32.gmra.mxu0 %v42
    %v127 = vpop.f32.mrf.mxu0
    %v128 = vadd.f32 %v32, %v127
    %v129 = vpop.f32.mrf.mxu0
    %130 = vmatprep.mubr.f32.mxu0 0.0
    %131 = vmatmul.mubr.f32.gmra.mxu0 %v45
    %v132 = vpop.f32.mrf.mxu0
    %v133 = vadd.f32 %v32, %v132
    %v134 = vpop.f32.mrf.mxu0
    %135 = vdwg.mxu0
    %v136 = vmax.f32 %v118, 0.0
    %v137 = vmax.f32 %v123, 0.0
    %v138 = vmax.f32 %v128, 0.0
    %v139 = vmax.f32 %v133, 0.0
    %vm140 = vcmask 261120
    %v141 = vsel %vm140, %v136, -inf
    %v142 = vsel %vm140, %v137, -inf
    %v143 = vmax.f32 %v141, %v142
    %v144 = vrot.slane %v143, 4
    %v145 = vmax.f32 %v143, %v144
    %v146 = vrot.slane %v145, 2
    %v147 = vmax.f32 %v145, %v146
    %v148 = vrot.slane %v147, 1
    %v149 = vmax.f32 %v147, %v148
    %v150 = vsel %vm140, %v138, -inf
    %v151 = vsel %vm140, %v139, -inf
    %v152 = vmax.f32 %v150, %v151
    %v153 = vrot.slane %v152, 4
    %v154 = vmax.f32 %v152, %v153
    %v155 = vrot.slane %v154, 2
    %v156 = vmax.f32 %v154, %v155
    %v157 = vrot.slane %v156, 1
    %v158 = vmax.f32 %v156, %v157
    %vm159 = vcmask 1040384
    %v160 = vsel %vm159, %v149, %v158
    %v161 = vld [vmem:[%s3] sm:$0xff]
    %v162 = vld [vmem:[%s3 + $0x8] sm:$0xff]
    %v163 = vld [vmem:[%s3 + $0x10] sm:$0xff]
    %v164 = vld [vmem:[%s3 + $0x18] sm:$0xff]
    %v165 = vld [vmem:[%s4] sm:$0x1]
    %v167 = vlaneseq
    %v168 = vshrl.u32 %v167, 7
    %v169 = vsub.s32 0, %v168
    %v170 = vrot.slane %v165, %v169
    %v173 = vsel %vm140, %v160, 0
    %175 = vmatprep.subr.mxu0 0.0
    %176 = vmatpush1.msra.mxu0 0.0
    %177 = vmatprep.subr.mxu0 0.0
    %178 = vmatpush1.msra.mxu0 0.0
    %179 = vmatprep.subr.mxu0 0.0
    %180 = vmatpush1.msra.mxu0 0.0
    %181 = vmatprep.subr.mxu0 0.0
    %182 = vmatpush1.msra.mxu0 0.0
    %183 = vmatprep.subr.mxu0 0.0
    %184 = vmatpush1.msra.mxu0 0.0
    %185 = vmatprep.subr.mxu0 0.0
    %186 = vmatpush1.msra.mxu0 0.0
    %187 = vmatprep.subr.mxu0 0.0
    %188 = vmatpush1.msra.mxu0 0.0
    %189 = vmatprep.subr.mxu0 0.0
    %190 = vmatpush1.msra.mxu0 0.0
    %191 = vmatprep.subr.mxu0 0.0
    %192 = vmatpush1.msra.mxu0 0.0
    %193 = vmatprep.subr.mxu0 0.0
    %194 = vmatpush1.msra.mxu0 0.0
    %195 = vmatprep.subr.mxu0 0.0
    %196 = vmatpush1.msra.mxu0 0.0
    %197 = vmatprep.subr.mxu0 0.0
    %198 = vmatpush1.msra.mxu0 0.0
    %199 = vmatprep.subr.mxu0 0.0
    %200 = vmatpush1.msra.mxu0 %v164
    %201 = vmatprep.subr.mxu0 0.0
    %202 = vmatpush1.msra.mxu0 %v163
    %203 = vmatprep.subr.mxu0 0.0
    %204 = vmatpush1.msra.mxu0 %v162
    %205 = vmatprep.subr.mxu0 0.0
    %206 = vmatpush1.msra.mxu0 %v161
    %207 = vmatprep.subr.mxu0 0.0
    %208 = vmatpush2.msra.mxu0 0.0
    %209 = vmatprep.subr.mxu0 0.0
    %210 = vmatpush2.msra.mxu0 0.0
    %211 = vmatprep.subr.mxu0 0.0
    %212 = vmatpush2.msra.mxu0 0.0
    %213 = vmatprep.subr.mxu0 0.0
    %214 = vmatpush2.msra.mxu0 0.0
    %215 = vmatprep.subr.mxu0 0.0
    %216 = vmatpush2.msra.mxu0 0.0
    %217 = vmatprep.subr.mxu0 0.0
    %218 = vmatpush2.msra.mxu0 0.0
    %219 = vmatprep.subr.mxu0 0.0
    %220 = vmatpush2.msra.mxu0 0.0
    %221 = vmatprep.subr.mxu0 0.0
    %222 = vmatpush2.msra.mxu0 0.0
    %223 = vmatprep.subr.mxu0 0.0
    %224 = vmatpush2.msra.mxu0 0.0
    %225 = vmatprep.subr.mxu0 0.0
    %226 = vmatpush2.msra.mxu0 0.0
    %227 = vmatprep.subr.mxu0 0.0
    %228 = vmatpush2.msra.mxu0 0.0
    %229 = vmatprep.subr.mxu0 0.0
    %230 = vmatpush2.msra.mxu0 0.0
    %231 = vmatprep.subr.mxu0 0.0
    %232 = vmatpush2.msra.mxu0 0.0
    %233 = vmatprep.subr.mxu0 0.0
    %234 = vmatpush2.msra.mxu0 0.0
    %235 = vmatprep.subr.mxu0 0.0
    %236 = vmatpush2.msra.mxu0 0.0
    %237 = vmatprep.subr.mxu0 0.0
    %238 = vmatpush2.msra.mxu0 0.0
    %239 = vmatprep.mubr.f32.mxu0 0.0
    %240 = vmatmul.mubr.f32.gmra.mxu0 %v173
    %v241 = vpop.f32.mrf.mxu0
    %v242 = vadd.f32 %v170, %v241
    %v243 = vpop.f32.mrf.mxu0
    %244 = vdwg.mxu0
    %vm245 = vcmask 58368
    %246 = vst.msk [vmem:[#allocation2] sm:$0x3] %vm245, %v242
    // Predicated region
    $region22: #{simple_cnn_forward.1} parent=1 // pred_check
      _
    $region23: #{simple_cnn_forward.1} parent=1 // pred_check_branch
      %248 = sbr.rel (0) target = $region25
    $region24: #{simple_cnn_forward.1} parent=1 // pred_region
      %s250 = ssub.s32 32, 32
      %251 = vsyncadd [#allocation3], %s250
      %s253 = sshll.u32 [#allocation2], 4
      %s254 = int_to_ptr.vmem [resolvable:$true] %s253
      %256 = dma.vmem_to_hbm [thread:$0]  %s254, 32, %s5, [#allocation3]
    $region25: #{simple_cnn_forward.1} parent=1 // pred_fallthru
      _
    // Predicated region
    $region26: #{simple_cnn_forward.1} parent=1 // pred_check
      _
    $region27: #{simple_cnn_forward.1} parent=1 // pred_check_branch
      %258 = sbr.rel (0) target = $region29
    $region28: #{simple_cnn_forward.1} parent=1 // pred_region
      %259 = dma.done [#allocation3], 32
    $region29: #{simple_cnn_forward.1} parent=1 // pred_fallthru
      _
    %260 = vsyncpa [#allocation3], 1

</llo_original>
